<compile_context>
chip_gen: v7x
topology: tpu7x:2x2x1
jax: 0.10.0
libtpu: 0.0.40
codegen_flags: <defaults>
</compile_context>

<pallas_src>
import jax
import jax.numpy as jnp
from jax.experimental import pallas as pl
from jax.experimental.pallas import tpu as pltpu


# --------------------------------------------------------------------------
# Phase 1: global-average-pool + 1x1 conv + BN + ReLU  ->  (N, C_out, 1)
# Grid: (N, C_in chunks).  The C_in axis is a reduction ("arbitrary").
# --------------------------------------------------------------------------
def aspp_head_kernel(x_ref, w_ref, scale_ref, bias_ref, y_ref, acc_ref):
    c = pl.program_id(1)

    @pl.when(c == 0)
    def _():
        acc_ref[...] = jnp.zeros_like(acc_ref)

    # Spatial sum over the lane-dense last axis (f32 accumulation, no upfront
    # full-block cast).  x block: (1, cin_blk, H*W) -> (1, cin_blk)
    part = jnp.sum(x_ref[...], axis=-1, dtype=jnp.float32)

    # Partial (sum @ W_chunk); weight already pre-transposed to (cin_blk, C_out).
    acc_ref[...] += jnp.dot(part, w_ref[...].astype(jnp.float32),
                            preferred_element_type=jnp.float32)

    @pl.when(c == pl.num_programs(1) - 1)
    def _():
        # BN (eval) + mean divisor are folded into scale/bias; then ReLU.
        y = acc_ref[...] * scale_ref[...] + bias_ref[...]          # (1, C_out)
        y = jnp.maximum(y, 0.0)
        y_ref[...] = y.reshape(y_ref.shape).astype(y_ref.dtype)    # (1, C_out, 1)


# --------------------------------------------------------------------------
# Phase 2: broadcast the per-channel vector over the spatial dims (== bilinear
# upsample of a 1x1 map).  Grid: (N, spatial tiles); pure lane-dense writer.
# --------------------------------------------------------------------------
def aspp_broadcast_kernel(y_ref, o_ref):
    y = y_ref[...]                                   # (1, C_out, 1)
    o_ref[...] = jnp.broadcast_to(y, o_ref.shape).astype(o_ref.dtype)


# --------------------------------------------------------------------------
# Tiling helpers
# --------------------------------------------------------------------------
def _pick_cin_block(c_in, hw, itemsize, target_bytes=4 << 20):
    """Largest multiple of 8 dividing c_in with block <= ~target_bytes."""
    if c_in % 8 != 0:
        return c_in                                  # must take the full dim
    max_ch = max(8, target_bytes // max(1, hw * itemsize))
    blk = max(8, min(c_in, (max_ch // 8) * 8))
    while c_in % blk != 0:
        blk -= 8
    return blk


def _pick_hw_tile(hw, target=4096):
    """Spatial tile: multiple of 128 dividing hw (or full hw)."""
    if hw <= target or hw % 128 != 0:
        return hw
    t = (min(target, hw) // 128) * 128
    while hw % t != 0:
        t -= 128
    return t


# --------------------------------------------------------------------------
# Wrapper
# --------------------------------------------------------------------------
def aspp_pooling(x, weight, gamma, beta, running_mean, running_var,
                 eps=1e-5, cin_block=None):
    """x: (N, C_in, H, W); weight: (C_out, C_in) == Conv2d 1x1 weight squeezed."""
    N, C_in, H, W = x.shape
    C_out = weight.shape[0]
    HW = H * W

    # Free, contiguous reshape: lane-dense spatial axis.
    x_flat = x.reshape(N, C_in, HW)

    # Wrapper-side transpose (free): weight (C_out, C_in) -> (C_in, C_out).
    w_t = jnp.asarray(weight).T

    # Fold eval-mode BN and the 1/(H*W) mean divisor into one scale/bias pair.
    inv_std = 1.0 / jnp.sqrt(running_var.astype(jnp.float32) + eps)
    g = gamma.astype(jnp.float32)
    scale = (g * inv_std / float(HW)).reshape(1, C_out)
    bias = (beta.astype(jnp.float32)
            - running_mean.astype(jnp.float32) * g * inv_std).reshape(1, C_out)

    if cin_block is None:
        cin_block = _pick_cin_block(C_in, HW, jnp.dtype(x.dtype).itemsize)
    assert C_in % cin_block == 0
    n_cin = C_in // cin_block

    # ---- Phase 1: tiny (N, C_out, 1) head ----
    y = pl.pallas_call(
        aspp_head_kernel,
        out_shape=jax.ShapeDtypeStruct((N, C_out, 1), jnp.float32),
        grid_spec=pltpu.PrefetchScalarGridSpec(
            num_scalar_prefetch=0,
            grid=(N, n_cin),
            in_specs=[
                pl.BlockSpec((1, cin_block, HW), lambda n, c: (n, c, 0)),
                pl.BlockSpec((cin_block, C_out), lambda n, c: (c, 0)),
                pl.BlockSpec((1, C_out), lambda n, c: (0, 0)),
                pl.BlockSpec((1, C_out), lambda n, c: (0, 0)),
            ],
            out_specs=pl.BlockSpec((1, C_out, 1), lambda n, c: (n, 0, 0)),
            scratch_shapes=[pltpu.VMEM((1, C_out), jnp.float32)],
        ),
        compiler_params=pltpu.CompilerParams(
            dimension_semantics=("parallel", "arbitrary")),
    )(x_flat, w_t, scale, bias)

    # ---- Phase 2: lane-dense broadcast writer ----
    hw_tile = _pick_hw_tile(HW)
    n_hw = HW // hw_tile

    out_flat = pl.pallas_call(
        aspp_broadcast_kernel,
        out_shape=jax.ShapeDtypeStruct((N, C_out, HW), x.dtype),
        grid_spec=pltpu.PrefetchScalarGridSpec(
            num_scalar_prefetch=0,
            grid=(N, n_hw),
            in_specs=[pl.BlockSpec((1, C_out, 1), lambda n, s: (n, 0, 0))],
            out_specs=pl.BlockSpec((1, C_out, hw_tile), lambda n, s: (n, 0, s)),
        ),
        compiler_params=pltpu.CompilerParams(
            dimension_semantics=("parallel", "parallel")),
    )(y)

    return out_flat.reshape(N, C_out, H, W)


# --------------------------------------------------------------------------
# Pure-JAX reference mirroring the PyTorch forward (eval-mode BN).
# --------------------------------------------------------------------------
def _reference(x, weight, gamma, beta, running_mean, running_var, eps=1e-5):
    gap = jnp.mean(x, axis=(2, 3))                       # (N, C_in)
    y = gap @ weight.T                                   # (N, C_out)
    y = (y - running_mean) / jnp.sqrt(running_var + eps) * gamma + beta
    y = jnp.maximum(y, 0.0)
    N, C_out = y.shape
    H, W = x.shape[2], x.shape[3]
    return jnp.broadcast_to(y[:, :, None, None], (N, C_out, H, W)).astype(x.dtype)


if __name__ == "__main__":
    key = jax.random.PRNGKey(0)
    k_x, k_w, k_g, k_b, k_m, k_v = jax.random.split(key, 6)

    # Shared BN params
    C_out = 8
    gamma = jax.random.normal(k_g, (C_out,), dtype=jnp.float32) * 0.1 + 1.0
    beta = jax.random.normal(k_b, (C_out,), dtype=jnp.float32) * 0.1
    running_mean = jax.random.normal(k_m, (C_out,), dtype=jnp.float32) * 0.1
    running_var = jax.random.uniform(k_v, (C_out,), dtype=jnp.float32,
                                     minval=0.5, maxval=1.5)

    # Config 1: tiny shapes (single C_in chunk, single spatial tile).
    N, C_in, H, W = 2, 4, 16, 16
    x = jax.random.normal(k_x, (N, C_in, H, W), dtype=jnp.float32)
    weight = jax.random.normal(k_w, (C_out, C_in), dtype=jnp.float32) * 0.1

    out = jax.block_until_ready(
        aspp_pooling(x, weight, gamma, beta, running_mean, running_var))
    ref = _reference(x, weight, gamma, beta, running_mean, running_var)
    assert out.shape == (N, C_out, H, W)
    assert jnp.allclose(out, ref, atol=1e-4, rtol=1e-4), "mismatch vs reference (cfg1)"

    # Config 2: exercises the C_in-chunked accumulator path (2 chunks of 8).
    C_in2 = 16
    x2 = jax.random.normal(k_x, (N, C_in2, H, W), dtype=jnp.float32)
    weight2 = jax.random.normal(k_w, (C_out, C_in2), dtype=jnp.float32) * 0.1

    out2 = jax.block_until_ready(
        aspp_pooling(x2, weight2, gamma, beta, running_mean, running_var,
                     cin_block=8))
    ref2 = _reference(x2, weight2, gamma, beta, running_mean, running_var)
    assert jnp.allclose(out2, ref2, atol=1e-4, rtol=1e-4), "mismatch vs reference (cfg2)"

    print("KERNEL_OK")
</pallas_src>

<mosaic_0001>
module attributes {stable_mosaic.version = 11 : i64} {
  func.func @aspp_head_kernel(%arg0: i32, %arg1: i32, %arg2: memref<1x4x256xf32, #tpu.memory_space<vmem>>, %arg3: memref<4x8xf32, #tpu.memory_space<vmem>>, %arg4: memref<1x8xf32, #tpu.memory_space<vmem>>, %arg5: memref<1x8xf32, #tpu.memory_space<vmem>>, %arg6: memref<1x8x1xf32, #tpu.memory_space<vmem>>, %arg7: memref<1x8xf32, #tpu.memory_space<vmem>>) attributes {dimension_semantics = [#tpu.dimension_semantics<parallel>, #tpu.dimension_semantics<arbitrary>], iteration_bounds = array<i64: 2, 1>, scalar_prefetch = 0 : i64, scratch_operands = 1 : i64, tpu.core_type = #tpu.core_type<tc>, window_params = [{transform_indices = @transform_0, window_bounds = array<i64: 1, 4, 256>}, {transform_indices = @transform_1, window_bounds = array<i64: 4, 8>}, {pipeline_mode = #tpu.pipeline_mode<synchronous>, transform_indices = @transform_2, window_bounds = array<i64: 1, 8>}, {pipeline_mode = #tpu.pipeline_mode<synchronous>, transform_indices = @transform_3, window_bounds = array<i64: 1, 8>}, {transform_indices = @transform_4, window_bounds = array<i64: 1, 8, 1>}]} {
    %c0_i32 = arith.constant 0 : i32
    %0 = arith.cmpi eq, %arg1, %c0_i32 : i32
    %1 = arith.extui %0 : i1 to i32
    %c0_i32_0 = arith.constant 0 : i32
    %2 = arith.cmpi ne, %1, %c0_i32_0 : i32
    scf.if %2 {
      %cst_12 = arith.constant 0.000000e+00 : f32
      %13 = vector.broadcast %cst_12 : f32 to vector<1x8xf32>
      %c0_13 = arith.constant 0 : index
      %c0_14 = arith.constant 0 : index
      %14 = vector.load %arg7[%c0_13, %c0_14] : memref<1x8xf32, #tpu.memory_space<vmem>>, vector<1x8xf32>
      tpu.vector_store %arg7[%c0_13, %c0_14], %13 {strides = array<i32>} : memref<1x8xf32, #tpu.memory_space<vmem>>, vector<1x8xf32>,
    } else {
    }
    %c0 = arith.constant 0 : index
    %c0_1 = arith.constant 0 : index
    %c0_2 = arith.constant 0 : index
    %3 = vector.load %arg2[%c0, %c0_1, %c0_2] : memref<1x4x256xf32, #tpu.memory_space<vmem>>, vector<1x4x256xf32>
    %cst = arith.constant dense<0.000000e+00> : vector<1x4xf32>
    %4 = vector.multi_reduction <add>, %3, %cst [2] : vector<1x4x256xf32> to vector<1x4xf32>
    %c0_3 = arith.constant 0 : index
    %c0_4 = arith.constant 0 : index
    %5 = vector.load %arg7[%c0_3, %c0_4] : memref<1x8xf32, #tpu.memory_space<vmem>>, vector<1x8xf32>
    %c0_5 = arith.constant 0 : index
    %c0_6 = arith.constant 0 : index
    %6 = vector.load %arg3[%c0_5, %c0_6] : memref<4x8xf32, #tpu.memory_space<vmem>>, vector<4x8xf32>
    %cst_7 = arith.constant dense<0.000000e+00> : vector<1x8xf32>
    %7 = tpu.matmul %4, %6, %cst_7 {dimension_numbers = #tpu.dot_dimension_numbers<[1], [0], [0], [1], [0, 0, 1, 1], [], []>} : vector<1x4xf32>, vector<4x8xf32>, vector<1x8xf32> -> vector<1x8xf32>
    %8 = arith.addf %5, %7 : vector<1x8xf32>
    %c0_8 = arith.constant 0 : index
    %c0_9 = arith.constant 0 : index
    %9 = vector.load %arg7[%c0_8, %c0_9] : memref<1x8xf32, #tpu.memory_space<vmem>>, vector<1x8xf32>
    tpu.vector_store %arg7[%c0_8, %c0_9], %8 {strides = array<i32>} : memref<1x8xf32, #tpu.memory_space<vmem>>, vector<1x8xf32>,
    %c0_i32_10 = arith.constant 0 : i32
    %10 = arith.cmpi eq, %arg1, %c0_i32_10 : i32
    %11 = arith.extui %10 : i1 to i32
    %c0_i32_11 = arith.constant 0 : i32
    %12 = arith.cmpi ne, %11, %c0_i32_11 : i32
    scf.if %12 {
      %c0_12 = arith.constant 0 : index
      %c0_13 = arith.constant 0 : index
      %13 = vector.load %arg7[%c0_12, %c0_13] : memref<1x8xf32, #tpu.memory_space<vmem>>, vector<1x8xf32>
      %c0_14 = arith.constant 0 : index
      %c0_15 = arith.constant 0 : index
      %14 = vector.load %arg4[%c0_14, %c0_15] : memref<1x8xf32, #tpu.memory_space<vmem>>, vector<1x8xf32>
      %15 = arith.mulf %13, %14 : vector<1x8xf32>
      %c0_16 = arith.constant 0 : index
      %c0_17 = arith.constant 0 : index
      %16 = vector.load %arg5[%c0_16, %c0_17] : memref<1x8xf32, #tpu.memory_space<vmem>>, vector<1x8xf32>
      %17 = arith.addf %15, %16 : vector<1x8xf32>
      %cst_18 = arith.constant 0.000000e+00 : f32
      %18 = vector.broadcast %cst_18 : f32 to vector<1x8xf32>
      %19 = arith.maximumf %17, %18 : vector<1x8xf32>
      %20 = vector.shape_cast %19 : vector<1x8xf32> to vector<1x8x1xf32>
      %c0_19 = arith.constant 0 : index
      %c0_20 = arith.constant 0 : index
      %c0_21 = arith.constant 0 : index
      %21 = vector.load %arg6[%c0_19, %c0_20, %c0_21] : memref<1x8x1xf32, #tpu.memory_space<vmem>>, vector<1x8x1xf32>
      tpu.vector_store %arg6[%c0_19, %c0_20, %c0_21], %20 {strides = array<i32>} : memref<1x8x1xf32, #tpu.memory_space<vmem>>, vector<1x8x1xf32>,
    } else {
    }
    return
  }
  func.func @transform_0(%arg0: i32, %arg1: i32) -> (i32, i32, i32) {
    %c0_i32 = arith.constant 0 : i32
    %c0_i32_0 = arith.constant 0 : i32
    return %arg0, %arg1, %c0_i32 : i32, i32, i32
  }
  func.func @transform_1(%arg0: i32, %arg1: i32) -> (i32, i32) {
    %c0_i32 = arith.constant 0 : i32
    %c0_i32_0 = arith.constant 0 : i32
    return %arg1, %c0_i32 : i32, i32
  }
  func.func @transform_2(%arg0: i32, %arg1: i32) -> (i32, i32) {
    %c0_i32 = arith.constant 0 : i32
    %c0_i32_0 = arith.constant 0 : i32
    %c0_i32_1 = arith.constant 0 : i32
    return %c0_i32, %c0_i32_0 : i32, i32
  }
  func.func @transform_3(%arg0: i32, %arg1: i32) -> (i32, i32) {
    %c0_i32 = arith.constant 0 : i32
    %c0_i32_0 = arith.constant 0 : i32
    %c0_i32_1 = arith.constant 0 : i32
    return %c0_i32, %c0_i32_0 : i32, i32
  }
  func.func @transform_4(%arg0: i32, %arg1: i32) -> (i32, i32, i32) {
    %c0_i32 = arith.constant 0 : i32
    %c0_i32_0 = arith.constant 0 : i32
    %c0_i32_1 = arith.constant 0 : i32
    return %arg0, %c0_i32, %c0_i32_0 : i32, i32, i32
  }
}

</mosaic_0001>

<llo_original>
// kernel: tpu_custom_call.1
$region0: #{tpu_custom_call.1}
  #allocation0 [shape = 'u32[]', space=smem, size = 0x4, offset = 0x4, fixed_abs, tag = 'smem constant byte address 0x4 - core index']
  #allocation1 [shape = 'u32[144,128]{1,0:T(1,128)}', space=vmem, size = 0x12000, scoped, tag = 'internal scratch']
  #allocation2 [shape = 'f32[1,8]{1,0:T(1,128)}', space=vmem, size = 0x200, scoped, tag = 'scratch operand']
  %s0 = inlined_call_operand.hbm [shape: f32[2,4,256], index: 0, kind: input, shape index: {}]
  %s1 = inlined_call_operand.hbm [shape: f32[4,8], index: 1, kind: input, shape index: {}]
  %s2 = inlined_call_operand.vmem [shape: f32[1,8], index: 2, kind: input, shape index: {}]
  %s3 = inlined_call_operand.vmem [shape: f32[1,8], index: 3, kind: input, shape index: {}]
  %s4 = inlined_call_operand.vmem [shape: f32[2,8,1], index: 4, kind: output, shape index: {}]
  %s5 = sld [smem:[#allocation0]]
  $region65: #{tpu_custom_call.1} parent=0
    _
  %s7 = ssub.s32 1, %s5
  %s8 = scalar_select 0, %s7, %s5
  $region1: #{tpu_custom_call.1} parent=0
    #allocation3 [shape = 'u8[8192]{0}', space=vmem, size = 0x2000, scoped, tag = 'input window, operand 0']
    #allocation4 [shape = 's32[2]{0}', space=sflag, size = 0x8, scoped, tag = 'scoped memory for tpu_custom_call.1']
    #allocation5 [shape = 'u8[2048]{0}', space=vmem, size = 0x800, scoped, tag = 'input window, operand 1, single buffered']
    #allocation6 [shape = 's32[1]{0}', space=sflag, size = 0x4, scoped, tag = 'scoped memory for tpu_custom_call.1']
    %9 = vsyncpa [#allocation4], 0
    %s10 = scalar_lea.sflag [#allocation4], 1
    %11 = vsyncpa %s10, 0
    %12 = vsyncpa [#allocation6], 0
    loop: start=0, step=1, limit=4
    $region2: #{tpu_custom_call.1} parent=1 // loop_pre_header
      _
    $region3: #{tpu_custom_call.1} parent=1 // loop_header
      %s14 = sphi 0, %s18
      %p15 = scmp.ge.s32.totalorder %s14, 4
      %s21 = sphi 0, %s33
      %s22 = sphi 0, %s29
      %s23 = sphi 0, %s21
      %s24 = sphi 0, %s22
      %s25 = sphi 0, %s23
      %s26 = sphi 0, %s24
      %s38 = sphi 0, %s40
      %s41 = sphi 0, %s38
      %s42 = sphi 0, %s41
      %s58 = sphi 0, %s42
      %s64 = sphi 0, %s66
      %s67 = sphi 0, %s64
      %s68 = sphi 0, %s67
      %s84 = sphi 0, %s68
      %s88 = sphi 0, %s88
      %s90 = sphi 0, %s88
      %s91 = sphi 0, %s90
      %s105 = sphi 0, %s91
      %s109 = sphi 0, %s109
      %s111 = sphi 0, %s109
      %s112 = sphi 0, %s111
      %s126 = sphi 0, %s112
      %s132 = sphi 0, %s134
      %s135 = sphi 0, %s132
      %s136 = sphi 0, %s135
      %s152 = sphi 0, %s136
    $region4: #{tpu_custom_call.1} parent=1 // loop_header_branch
      %17 = sbr.rel (%p15) target = $region8
    $region5: #{tpu_custom_call.1} parent=1 // loop_body
      %s19 = ssub.s32 %s14, 1
      %s20 = ssub.s32 %s14, 2
      %s27 = sadd.s32 1, %s22
      %p28 = scmp.ge.s32.totalorder %s27, 1
      %s29 = scalar_select %p28, 0, %s27
      %s30 = sadd.s32 1, %s21
      %s31 = scalar_select %p28, %s30, %s21
      %p32 = scmp.ge.s32.totalorder %s31, 2
      %s33 = scalar_select %p32, 0, %s31
      %s34 = ssub.s32 %s21, %s33
      %s35 = ssub.s32 %s22, %s29
      %s36 = sor.u32 %s34, %s35
      %p37 = scmp.eq.s32.totalorder %s36, 0
      %s39 = sadd.s32 %s38, 1
      %s40 = scalar_select %p37, %s38, %s39
      %p43 = pneg %p37
      %p44 = scmp.eq.s32.totalorder %s14, 1
      %p45 = por %p43, %p44
      %p46 = scmp.ne.s32.totalorder %s38, %s41
      %p47 = scmp.eq.s32.totalorder %s14, 0
      %p48 = por %p46, %p47
      %p49 = scmp.ne.s32.totalorder %s38, %s41
      %p50 = scmp.eq.s32.totalorder %s19, 1
      %p51 = por %p49, %p50
      %p52 = scmp.ne.s32.totalorder %s41, %s42
      %p53 = scmp.eq.s32.totalorder %s19, 0
      %p54 = por %p52, %p53
      %p55 = scmp.ne.s32.totalorder %s41, %s42
      %p56 = scmp.eq.s32.totalorder %s20, 1
      %p57 = por %p55, %p56
      %p59 = scmp.ne.s32.totalorder %s42, %s58
      %p60 = scmp.eq.s32.totalorder %s20, 0
      %p61 = por %p59, %p60
      %s62 = ssub.s32 %s22, %s29
      %p63 = scmp.eq.s32.totalorder %s62, 0
      %s65 = sadd.s32 %s64, 1
      %s66 = scalar_select %p63, %s64, %s65
      %p69 = pneg %p63
      %p70 = scmp.eq.s32.totalorder %s14, 1
      %p71 = por %p69, %p70
      %p72 = scmp.ne.s32.totalorder %s64, %s67
      %p73 = scmp.eq.s32.totalorder %s14, 0
      %p74 = por %p72, %p73
      %p75 = scmp.ne.s32.totalorder %s64, %s67
      %p76 = scmp.eq.s32.totalorder %s19, 1
      %p77 = por %p75, %p76
      %p78 = scmp.ne.s32.totalorder %s67, %s68
      %p79 = scmp.eq.s32.totalorder %s19, 0
      %p80 = por %p78, %p79
      %p81 = scmp.ne.s32.totalorder %s67, %s68
      %p82 = scmp.eq.s32.totalorder %s20, 1
      %p83 = por %p81, %p82
      %p85 = scmp.ne.s32.totalorder %s68, %s84
      %p86 = scmp.eq.s32.totalorder %s20, 0
      %p87 = por %p85, %p86
      %s89 = sadd.s32 %s88, 1
      %p92 = scmp.eq.s32.totalorder %s14, 1
      %p93 = scmp.ne.s32.totalorder %s88, %s90
      %p94 = scmp.eq.s32.totalorder %s14, 0
      %p95 = por %p93, %p94
      %p96 = scmp.ne.s32.totalorder %s88, %s90
      %p97 = scmp.eq.s32.totalorder %s19, 1
      %p98 = por %p96, %p97
      %p99 = scmp.ne.s32.totalorder %s90, %s91
      %p100 = scmp.eq.s32.totalorder %s19, 0
      %p101 = por %p99, %p100
      %p102 = scmp.ne.s32.totalorder %s90, %s91
      %p103 = scmp.eq.s32.totalorder %s20, 1
      %p104 = por %p102, %p103
      %p106 = scmp.ne.s32.totalorder %s91, %s105
      %p107 = scmp.eq.s32.totalorder %s20, 0
      %p108 = por %p106, %p107
      %s110 = sadd.s32 %s109, 1
      %p113 = scmp.eq.s32.totalorder %s14, 1
      %p114 = scmp.ne.s32.totalorder %s109, %s111
      %p115 = scmp.eq.s32.totalorder %s14, 0
      %p116 = por %p114, %p115
      %p117 = scmp.ne.s32.totalorder %s109, %s111
      %p118 = scmp.eq.s32.totalorder %s19, 1
      %p119 = por %p117, %p118
      %p120 = scmp.ne.s32.totalorder %s111, %s112
      %p121 = scmp.eq.s32.totalorder %s19, 0
      %p122 = por %p120, %p121
      %p123 = scmp.ne.s32.totalorder %s111, %s112
      %p124 = scmp.eq.s32.totalorder %s20, 1
      %p125 = por %p123, %p124
      %p127 = scmp.ne.s32.totalorder %s112, %s126
      %p128 = scmp.eq.s32.totalorder %s20, 0
      %p129 = por %p127, %p128
      %s130 = ssub.s32 %s21, %s33
      %p131 = scmp.eq.s32.totalorder %s130, 0
      %s133 = sadd.s32 %s132, 1
      %s134 = scalar_select %p131, %s132, %s133
      %p137 = pneg %p131
      %p138 = scmp.eq.s32.totalorder %s14, 1
      %p139 = por %p137, %p138
      %p140 = scmp.ne.s32.totalorder %s132, %s135
      %p141 = scmp.eq.s32.totalorder %s14, 0
      %p142 = por %p140, %p141
      %p143 = scmp.ne.s32.totalorder %s132, %s135
      %p144 = scmp.eq.s32.totalorder %s19, 1
      %p145 = por %p143, %p144
      %p146 = scmp.ne.s32.totalorder %s135, %s136
      %p147 = scmp.eq.s32.totalorder %s19, 0
      %p148 = por %p146, %p147
      %p149 = scmp.ne.s32.totalorder %s135, %s136
      %p150 = scmp.eq.s32.totalorder %s20, 1
      %p151 = por %p149, %p150
      %p153 = scmp.ne.s32.totalorder %s136, %s152
      %p154 = scmp.eq.s32.totalorder %s20, 0
      %p155 = por %p153, %p154
      %p156 = scmp.le.s32.totalorder 1, %s14
      %p157 = scmp.lt.s32.totalorder %s14, 3
      %p158 = pnand %p156, %p157
      %p159 = pneg %p158
      // Predicated region
      $region9: #{tpu_custom_call.1} parent=5 // pred_check
        _
      $region10: #{tpu_custom_call.1} parent=5 // pred_check_branch
        %161 = sbr.rel (%p158) target = $region12
      $region11: #{tpu_custom_call.1} parent=5 // pred_region
        %s162 = ssub.s32 %s14, 1
        // Predicated region
        $region13: #{tpu_custom_call.1} parent=11 // pred_check
          %p163 = pneg %p80
        $region14: #{tpu_custom_call.1} parent=11 // pred_check_branch
          %165 = sbr.rel (%p163) target = $region16
        $region15: #{tpu_custom_call.1} parent=11 // pred_region
          %s167 = ssub.s32 64, 64
          %168 = vsyncadd [#allocation6], %s167
          %s169 = smul.addr %s24, 64
          %s170 = scalar_lea.hbm %s1, %s169
          %s172 = sshll.u32 [#allocation5], 4
          %s173 = int_to_ptr.vmem [resolvable:$true] %s172
          %175 = dma.hbm_to_vmem [thread:$0]  %s170, 64, %s173, [#allocation6]
        $region16: #{tpu_custom_call.1} parent=11 // pred_fallthru
          _
        // Predicated region
        $region17: #{tpu_custom_call.1} parent=11 // pred_check
          %p176 = pneg %p101
        $region18: #{tpu_custom_call.1} parent=11 // pred_check_branch
          %178 = sbr.rel (%p176) target = $region20
        $region19: #{tpu_custom_call.1} parent=11 // pred_region
          _
        $region20: #{tpu_custom_call.1} parent=11 // pred_fallthru
          _
        // Predicated region
        $region21: #{tpu_custom_call.1} parent=11 // pred_check
          %p179 = pneg %p122
        $region22: #{tpu_custom_call.1} parent=11 // pred_check_branch
          %181 = sbr.rel (%p179) target = $region24
        $region23: #{tpu_custom_call.1} parent=11 // pred_region
          _
        $region24: #{tpu_custom_call.1} parent=11 // pred_fallthru
          _
      $region12: #{tpu_custom_call.1} parent=5 // pred_fallthru
        _
      %p182 = scmp.lt.s32.totalorder %s14, 2
      // Predicated region
      $region25: #{tpu_custom_call.1} parent=5 // pred_check
        %p183 = pneg %p182
      $region26: #{tpu_custom_call.1} parent=5 // pred_check_branch
        %185 = sbr.rel (%p183) target = $region28
      $region27: #{tpu_custom_call.1} parent=5 // pred_region
        // Predicated region
        $region29: #{tpu_custom_call.1} parent=27 // pred_check
          %p186 = pneg %p48
        $region30: #{tpu_custom_call.1} parent=27 // pred_check_branch
          %188 = sbr.rel (%p186) target = $region32
        $region31: #{tpu_custom_call.1} parent=27 // pred_region
          %s189 = sand.u32 %s38, 1
          %s190 = scalar_lea.sflag [#allocation4], %s189
          %s191 = sand.u32 %s38, 1
          %s192 = smul.addr %s191, 8
          %s193 = scalar_lea.vmem [#allocation3], %s192
          %s195 = ssub.s32 128, 128
          %196 = vsyncadd %s190, %s195
          %s197 = smul.addr %s22, 2
          %s198 = smul.addr %s21, 2
          %s199 = sadd.s32 %s197, %s198
          %s200 = smul.addr %s199, 64
          %s201 = scalar_lea.hbm %s0, %s200
          %s203 = sshll.u32 %s193, 4
          %s204 = int_to_ptr.vmem [resolvable:$true] %s203
          %206 = dma.hbm_to_vmem [thread:$0]  %s201, 128, %s204, %s190
        $region32: #{tpu_custom_call.1} parent=27 // pred_fallthru
          _
      $region28: #{tpu_custom_call.1} parent=5 // pred_fallthru
        _
      %p207 = scmp.le.s32.totalorder 1, %s14
      %p208 = scmp.lt.s32.totalorder %s14, 3
      %p209 = pnand %p207, %p208
      %p210 = pneg %p209
      // Predicated region
      $region33: #{tpu_custom_call.1} parent=5 // pred_check
        _
      $region34: #{tpu_custom_call.1} parent=5 // pred_check_branch
        %212 = sbr.rel (%p209) target = $region36
      $region35: #{tpu_custom_call.1} parent=5 // pred_region
        %s213 = ssub.s32 %s14, 1
        %s214 = sand.u32 %s41, 1
        %s215 = scalar_lea.sflag [#allocation4], %s214
        %s216 = sand.u32 %s41, 1
        %s217 = smul.addr %s216, 8
        %s218 = scalar_lea.vmem [#allocation3], %s217
        // Predicated region
        $region37: #{tpu_custom_call.1} parent=35 // pred_check
          %p219 = pneg %p54
        $region38: #{tpu_custom_call.1} parent=35 // pred_check_branch
          %221 = sbr.rel (%p219) target = $region40
        $region39: #{tpu_custom_call.1} parent=35 // pred_region
          %222 = dma.done %s215, 128
        $region40: #{tpu_custom_call.1} parent=35 // pred_fallthru
          _
        // Predicated region
        $region41: #{tpu_custom_call.1} parent=35 // pred_check
          %p223 = pneg %p80
        $region42: #{tpu_custom_call.1} parent=35 // pred_check_branch
          %225 = sbr.rel (%p223) target = $region44
        $region43: #{tpu_custom_call.1} parent=35 // pred_region
          %226 = dma.done [#allocation6], 64
        $region44: #{tpu_custom_call.1} parent=35 // pred_fallthru
          _
        %s227 = sand.u32 %s41, 1
        %s228 = scalar_lea.sflag [#allocation4], %s227
        %s229 = sand.u32 %s41, 1
        %s230 = smul.addr %s229, 8
        %s231 = scalar_lea.vmem [#allocation3], %s230
        %p232 = pneg %p54
        %p233 = pneg %p51
        %p234 = pneg %p80
        %p235 = pneg %p77
        %p236 = pneg %p101
        %p237 = pneg %p98
        %p238 = pneg %p122
        %p239 = pneg %p119
        %p240 = pneg %p148
        %p241 = pneg %p145
        %p242 = scmp.lt.s32.totalorder %s23, 1
        %s243 = scalar_select %p242, %s23, 1
        %s244 = smul.addr %s243, 8
        %s245 = scalar_lea.vmem %s4, %s244
        %p246 = scmp.lt.s32.totalorder %s23, 1
        %s247 = scalar_select %p246, %s23, 1
        %s248 = smul.addr %s247, 8
        %s249 = scalar_lea.vmem %s4, %s248
        %p250 = scmp.eq.s32.totalorder %s24, 0
        // Predicated region
        $region45: #{tpu_custom_call.1} parent=35 // pred_check
          %p251 = pneg %p250
        $region46: #{tpu_custom_call.1} parent=35 // pred_check_branch
          %253 = sbr.rel (%p251) target = $region48
        $region47: #{tpu_custom_call.1} parent=35 // pred_region
          %vm254 = vcmask 57344
          %255 = vst.msk [vmem:[#allocation2] sm:$0x1] %vm254, 0.0
        $region48: #{tpu_custom_call.1} parent=35 // pred_fallthru
          _
        %v256 = vld [vmem:[%s218] sm:$0xff]
        %v258 = vcombine.high %v256, %v256
        %vm260 = vcmask 1043456
        %v261 = vsel %vm260, %v256, 0.0
        %v262 = vsel %vm260, %v258, 0.0
        %v263 = vadd.f32 %v261, %v262
        %264 = vadd.xlane.f32.xlu0 %v263
        %v265 = vpop.xlane.xlu0 %264
        %v266 = vld [vmem:[#allocation2] sm:$0x1]
        %v267 = vld [vmem:[#allocation5] sm:$0xf]
        %v269 = vlaneseq
        %v270 = vand.u32 %v269, 127
        %v271 = vlaneseq
        %v272 = vshrl.u32 %v271, 7
        %v273 = vsub.s32 %v270, %v272
        %v274 = vrot.slane %v265, %v273
        %vm275 = vcmask 31744
        %v276 = vsel %vm275, %v274, 0
        %v279 = vsel %vm260, %v267, 0
        %281 = vmatprep.subr.mxu0 0.0
        %282 = vmatpush1.msra.mxu0 %v279
        %283 = vmatprep.subr.mxu0 0.0
        %284 = vmatpush1.msra.mxu0 0.0
        %285 = vmatprep.subr.mxu0 0.0
        %286 = vmatpush1.msra.mxu0 0.0
        %287 = vmatprep.subr.mxu0 0.0
        %288 = vmatpush1.msra.mxu0 0.0
        %289 = vmatprep.subr.mxu0 0.0
        %290 = vmatpush1.msra.mxu0 0.0
        %291 = vmatprep.subr.mxu0 0.0
        %292 = vmatpush1.msra.mxu0 0.0
        %293 = vmatprep.subr.mxu0 0.0
        %294 = vmatpush1.msra.mxu0 0.0
        %295 = vmatprep.subr.mxu0 0.0
        %296 = vmatpush1.msra.mxu0 0.0
        %297 = vmatprep.subr.mxu0 0.0
        %298 = vmatpush1.msra.mxu0 0.0
        %299 = vmatprep.subr.mxu0 0.0
        %300 = vmatpush1.msra.mxu0 0.0
        %301 = vmatprep.subr.mxu0 0.0
        %302 = vmatpush1.msra.mxu0 0.0
        %303 = vmatprep.subr.mxu0 0.0
        %304 = vmatpush1.msra.mxu0 0.0
        %305 = vmatprep.subr.mxu0 0.0
        %306 = vmatpush1.msra.mxu0 0.0
        %307 = vmatprep.subr.mxu0 0.0
        %308 = vmatpush1.msra.mxu0 0.0
        %309 = vmatprep.subr.mxu0 0.0
        %310 = vmatpush1.msra.mxu0 0.0
        %311 = vmatprep.subr.mxu0 0.0
        %312 = vmatpush1.msra.mxu0 0.0
        %313 = vmatprep.subr.mxu0 0.0
        %314 = vmatpush1.msra.mxu0 0.0
        %315 = vmatprep.subr.mxu0 0.0
        %316 = vmatpush1.msra.mxu0 0.0
        %317 = vmatprep.subr.mxu0 0.0
        %318 = vmatpush1.msra.mxu0 0.0
        %319 = vmatprep.subr.mxu0 0.0
        %320 = vmatpush1.msra.mxu0 0.0
        %321 = vmatprep.subr.mxu0 0.0
        %322 = vmatpush1.msra.mxu0 0.0
        %323 = vmatprep.subr.mxu0 0.0
        %324 = vmatpush1.msra.mxu0 0.0
        %325 = vmatprep.subr.mxu0 0.0
        %326 = vmatpush1.msra.mxu0 0.0
        %327 = vmatprep.subr.mxu0 0.0
        %328 = vmatpush1.msra.mxu0 0.0
        %329 = vmatprep.subr.mxu0 0.0
        %330 = vmatpush1.msra.mxu0 0.0
        %331 = vmatprep.subr.mxu0 0.0
        %332 = vmatpush1.msra.mxu0 0.0
        %333 = vmatprep.subr.mxu0 0.0
        %334 = vmatpush1.msra.mxu0 0.0
        %335 = vmatprep.subr.mxu0 0.0
        %336 = vmatpush1.msra.mxu0 0.0
        %337 = vmatprep.subr.mxu0 0.0
        %338 = vmatpush1.msra.mxu0 0.0
        %339 = vmatprep.subr.mxu0 0.0
        %340 = vmatpush1.msra.mxu0 0.0
        %341 = vmatprep.subr.mxu0 0.0
        %342 = vmatpush1.msra.mxu0 0.0
        %343 = vmatprep.subr.mxu0 0.0
        %344 = vmatpush1.msra.mxu0 0.0
        %345 = vmatprep.mubr.f32.mxu0 0.0
        %346 = vmatmul.mubr.f32.gmra.mrb[0].mxu0 %v276
        %v347 = vpop.f32.mrb[0].mxu0
        %v348 = vadd.f32 0.0, %v347
        %v349 = vpop.f32.mrb[0].mxu0
        %350 = vdwg.mxu0
        %v351 = vadd.f32 %v266, %v348
        %vm352 = vcmask 57344
        %353 = vst.msk [vmem:[#allocation2] sm:$0x1] %vm352, %v351
        // Predicated region
        $region49: #{tpu_custom_call.1} parent=35 // pred_check
          %p354 = pneg %p250
        $region50: #{tpu_custom_call.1} parent=35 // pred_check_branch
          %356 = sbr.rel (%p354) target = $region52
        $region51: #{tpu_custom_call.1} parent=35 // pred_region
          %v357 = vld [vmem:[#allocation2] sm:$0x1]
          %v358 = vld [vmem:[%s2] sm:$0x1]
          %v359 = vmul.f32 %v357, %v358
          %v360 = vld [vmem:[%s3] sm:$0x1]
          %v361 = vadd.f32 %v359, %v360
          %v362 = vmax.f32 %v361, 0.0
          %v363 = vlaneseq
          %v364 = vshrl.u32 %v363, 7
          %v365 = vsub.s32 0, %v364
          %v366 = vrot.slane %v362, %v365
          %368 = vbcast.lane.b32.xlu0 %v366, 256
          %v369 = vpop.permute.xlu0 %368
          %vm370 = vcmask 7168
          %371 = vst.msk [vmem:[%s249] sm:$0xff] %vm370, %v369
        $region52: #{tpu_custom_call.1} parent=35 // pred_fallthru
          _
        %p372 = scmp.lt.s32.totalorder %s23, 1
        %s373 = scalar_select %p372, %s23, 1
        %s374 = smul.addr %s373, 8
        %s375 = scalar_lea.vmem %s4, %s374
        // Predicated region
        $region53: #{tpu_custom_call.1} parent=35 // pred_check
          %p376 = pneg %p145
        $region54: #{tpu_custom_call.1} parent=35 // pred_check_branch
          %378 = sbr.rel (%p376) target = $region56
        $region55: #{tpu_custom_call.1} parent=35 // pred_region
          _
        $region56: #{tpu_custom_call.1} parent=35 // pred_fallthru
          _
      $region36: #{tpu_custom_call.1} parent=5 // pred_fallthru
        _
      %p379 = scmp.le.s32.totalorder 2, %s14
      // Predicated region
      $region57: #{tpu_custom_call.1} parent=5 // pred_check
        %p380 = pneg %p379
      $region58: #{tpu_custom_call.1} parent=5 // pred_check_branch
        %382 = sbr.rel (%p380) target = $region60
      $region59: #{tpu_custom_call.1} parent=5 // pred_region
        %s383 = ssub.s32 %s14, 2
        // Predicated region
        $region61: #{tpu_custom_call.1} parent=59 // pred_check
          %p384 = pneg %p151
        $region62: #{tpu_custom_call.1} parent=59 // pred_check_branch
          %386 = sbr.rel (%p384) target = $region64
        $region63: #{tpu_custom_call.1} parent=59 // pred_region
          %p387 = scmp.lt.s32.totalorder %s25, 1
          %s388 = scalar_select %p387, %s25, 1
          %s389 = smul.addr %s388, 8
          %s390 = scalar_lea.vmem %s4, %s389
        $region64: #{tpu_custom_call.1} parent=59 // pred_fallthru
          _
      $region60: #{tpu_custom_call.1} parent=5 // pred_fallthru
        _
    $region6: #{tpu_custom_call.1} parent=1 // loop_footer
      %s18 = sadd.s32 1, %s14
    $region7: #{tpu_custom_call.1} parent=1 // loop_footer_branch
      %13 = sbr.rel target = $region3
    $region8: #{tpu_custom_call.1} parent=1 // loop_exit
      _
    %391 = vsyncpa [#allocation4], 1
    %s392 = scalar_lea.sflag [#allocation4], 1
    %393 = vsyncpa %s392, 1
    %394 = vsyncpa [#allocation6], 1

</llo_original>
